<compile_context>
chip_gen: v7x
topology: tpu7x:2x2x1
jax: 0.10.0
libtpu: 0.0.40
codegen_flags: <defaults>
</compile_context>

<pallas_src>
import functools

import jax
import jax.numpy as jnp
from jax.experimental import pallas as pl
from jax.experimental.pallas import tpu as pltpu

GAMMA = 2.0   # exactly 2 -> squares instead of pow in the kernel
EPS = 0.01
LANES = 128


def _round_up(x, m):
    return (x + m - 1) // m * m


def _focal_loss_kernel(pred_ref, gt_ref, out_ref, acc_ref, *,
                       total_elems, block_elems, n_inner, needs_mask):
    o = pl.program_id(0)
    i = pl.program_id(1)

    @pl.when(i == 0)
    def _():
        acc_ref[...] = jnp.zeros_like(acc_ref)

    p = pred_ref[...].astype(jnp.float32)
    g = gt_ref[...].astype(jnp.float32)

    # pred.clamp(eps, 1 - eps)
    p = jnp.clip(p, EPS, 1.0 - EPS)
    omp = 1.0 - p

    # -(gt * (1-p)^2 * log(p) + (1-gt) * p^2 * log(1-p))
    loss = -(g * (omp * omp) * jnp.log(p) + (1.0 - g) * (p * p) * jnp.log(omp))

    tile_rows, lanes = loss.shape
    if needs_mask:
        # mask out zero-padded tail elements (their loss would be nonzero).
        block_start = (o * n_inner + i) * block_elems
        row_idx = jax.lax.broadcasted_iota(jnp.int32, (tile_rows, lanes), 0)
        lane_idx = jax.lax.broadcasted_iota(jnp.int32, (tile_rows, lanes), 1)
        flat_idx = block_start + row_idx * lanes + lane_idx
        loss = jnp.where(flat_idx < total_elems, loss, 0.0)

    # Reduce the tile to one vreg of partial sums (pure VPU adds across
    # sublane groups), accumulate in the vreg-shaped VMEM scratch.
    acc_ref[...] += loss.reshape(tile_rows // 8, 8, lanes).sum(axis=0)

    @pl.when(i == n_inner - 1)
    def _():
        out_ref[...] = acc_ref[...]


def focal_loss(pred, gt, *, tile_rows=4096, max_parallel=2, input_dtype=None):
    """Mean focal loss over all elements (matches the PyTorch module)."""
    assert pred.shape == gt.shape
    total = int(pred.size)
    assert total > 0

    rows = pl.cdiv(total, LANES)
    # Don't over-pad tiny inputs; keep tile_rows a multiple of 8.
    tile_rows_eff = _round_up(min(tile_rows, _round_up(rows, 8)), 8)
    n_blocks = pl.cdiv(rows, tile_rows_eff)
    n_outer = min(max_parallel, n_blocks)      # "parallel" axis (v7x megacore)
    n_inner = pl.cdiv(n_blocks, n_outer)       # "arbitrary" reduction axis
    padded_rows = n_outer * n_inner * tile_rows_eff
    padded_total = padded_rows * LANES
    block_elems = tile_rows_eff * LANES
    needs_mask = padded_total != total

    p_flat = pred.reshape(-1)
    g_flat = gt.reshape(-1)
    if input_dtype is not None:
        # Optional: halve HBM traffic (e.g. jnp.bfloat16); math stays f32.
        p_flat = p_flat.astype(input_dtype)
        g_flat = g_flat.astype(input_dtype)
    if needs_mask:
        pad = padded_total - total
        p_flat = jnp.pad(p_flat, (0, pad))
        g_flat = jnp.pad(g_flat, (0, pad))
    p2d = p_flat.reshape(padded_rows, LANES)
    g2d = g_flat.reshape(padded_rows, LANES)

    kernel = functools.partial(
        _focal_loss_kernel,
        total_elems=total,
        block_elems=block_elems,
        n_inner=n_inner,
        needs_mask=needs_mask,
    )

    partials = pl.pallas_call(
        kernel,
        out_shape=jax.ShapeDtypeStruct((n_outer, 8, LANES), jnp.float32),
        grid_spec=pltpu.PrefetchScalarGridSpec(
            num_scalar_prefetch=0,
            grid=(n_outer, n_inner),
            in_specs=[
                pl.BlockSpec((tile_rows_eff, LANES),
                             lambda o, i: (o * n_inner + i, 0)),
                pl.BlockSpec((tile_rows_eff, LANES),
                             lambda o, i: (o * n_inner + i, 0)),
            ],
            out_specs=pl.BlockSpec((None, 8, LANES), lambda o, i: (o, 0, 0)),
            scratch_shapes=[pltpu.VMEM((8, LANES), jnp.float32)],
        ),
        compiler_params=pltpu.CompilerParams(
            dimension_semantics=("parallel", "arbitrary")),
    )(p2d, g2d)

    # Final tiny cross-lane reduce + mean outside the kernel.
    return jnp.sum(partials) / jnp.float32(total)


def focal_loss_ref(pred, gt):
    p = jnp.clip(pred, EPS, 1.0 - EPS)
    loss = -(gt * (1.0 - p) ** GAMMA * jnp.log(p)
             + (1.0 - gt) * p ** GAMMA * jnp.log(1.0 - p))
    return jnp.mean(loss)


if __name__ == "__main__":
    key = jax.random.PRNGKey(0)
    k1, k2, k3, k4 = jax.random.split(key, 4)

    # NCHW inputs: pred in (0,1) (e.g. sigmoid output), gt binary mask.
    shape = (2, 4, 16, 16)
    pred = jax.nn.sigmoid(jax.random.normal(k1, shape, dtype=jnp.float32))
    gt = (jax.random.uniform(k2, shape) > 0.5).astype(jnp.float32)

    out = focal_loss(pred, gt)
    jax.block_until_ready(out)
    ref = focal_loss_ref(pred, gt)
    assert jnp.allclose(out, ref, rtol=1e-5, atol=1e-6), (out, ref)

    # Also exercise the padding/mask path (total not a multiple of a block).
    shape2 = (2, 3, 13, 16)
    pred2 = jax.nn.sigmoid(jax.random.normal(k3, shape2, dtype=jnp.float32))
    gt2 = (jax.random.uniform(k4, shape2) > 0.5).astype(jnp.float32)
    out2 = focal_loss(pred2, gt2)
    jax.block_until_ready(out2)
    ref2 = focal_loss_ref(pred2, gt2)
    assert jnp.allclose(out2, ref2, rtol=1e-5, atol=1e-6), (out2, ref2)

    print("KERNEL_OK")
</pallas_src>

<mosaic_0001>
module attributes {stable_mosaic.version = 11 : i64} {
  func.func @_focal_loss_kernel(%arg0: i32, %arg1: i32, %arg2: memref<16x128xf32, #tpu.memory_space<vmem>>, %arg3: memref<16x128xf32, #tpu.memory_space<vmem>>, %arg4: memref<1x8x128xf32, #tpu.memory_space<vmem>>, %arg5: memref<8x128xf32, #tpu.memory_space<vmem>>) attributes {dimension_semantics = [#tpu.dimension_semantics<parallel>, #tpu.dimension_semantics<arbitrary>], iteration_bounds = array<i64: 1, 1>, scalar_prefetch = 0 : i64, scratch_operands = 1 : i64, tpu.core_type = #tpu.core_type<tc>, window_params = [{transform_indices = @transform_0, window_bounds = array<i64: 16, 128>}, {transform_indices = @transform_1, window_bounds = array<i64: 16, 128>}, {transform_indices = @transform_2, window_bounds = array<i64: 1, 8, 128>}]} {
    %c0_i32 = arith.constant 0 : i32
    %0 = arith.cmpi eq, %arg1, %c0_i32 : i32
    %1 = arith.extui %0 : i1 to i32
    %c0_i32_0 = arith.constant 0 : i32
    %2 = arith.cmpi ne, %1, %c0_i32_0 : i32
    scf.if %2 {
      %cst_15 = arith.constant 0.000000e+00 : f32
      %32 = vector.broadcast %cst_15 : f32 to vector<8x128xf32>
      %c0_16 = arith.constant 0 : index
      %c0_17 = arith.constant 0 : index
      %33 = vector.load %arg5[%c0_16, %c0_17] : memref<8x128xf32, #tpu.memory_space<vmem>>, vector<8x128xf32>
      tpu.vector_store %arg5[%c0_16, %c0_17], %32 {strides = array<i32>} : memref<8x128xf32, #tpu.memory_space<vmem>>, vector<8x128xf32>,
    } else {
    }
    %c0 = arith.constant 0 : index
    %c0_1 = arith.constant 0 : index
    %3 = vector.load %arg2[%c0, %c0_1] : memref<16x128xf32, #tpu.memory_space<vmem>>, vector<16x128xf32>
    %c0_2 = arith.constant 0 : index
    %c0_3 = arith.constant 0 : index
    %4 = vector.load %arg3[%c0_2, %c0_3] : memref<16x128xf32, #tpu.memory_space<vmem>>, vector<16x128xf32>
    %cst = arith.constant 0.00999999977 : f32
    %cst_4 = arith.constant 9.900000e-01 : f32
    %5 = vector.broadcast %cst : f32 to vector<16x128xf32>
    %6 = arith.maximumf %5, %3 : vector<16x128xf32>
    %7 = vector.broadcast %cst_4 : f32 to vector<16x128xf32>
    %8 = arith.minimumf %7, %6 : vector<16x128xf32>
    %cst_5 = arith.constant 1.000000e+00 : f32
    %9 = vector.broadcast %cst_5 : f32 to vector<16x128xf32>
    %10 = arith.subf %9, %8 : vector<16x128xf32>
    %11 = arith.mulf %10, %10 : vector<16x128xf32>
    %12 = arith.mulf %4, %11 : vector<16x128xf32>
    %13 = math.log %8 : vector<16x128xf32>
    %14 = arith.mulf %12, %13 : vector<16x128xf32>
    %cst_6 = arith.constant 1.000000e+00 : f32
    %15 = vector.broadcast %cst_6 : f32 to vector<16x128xf32>
    %16 = arith.subf %15, %4 : vector<16x128xf32>
    %17 = arith.mulf %8, %8 : vector<16x128xf32>
    %18 = arith.mulf %16, %17 : vector<16x128xf32>
    %19 = math.log %10 : vector<16x128xf32>
    %20 = arith.mulf %18, %19 : vector<16x128xf32>
    %21 = arith.addf %14, %20 : vector<16x128xf32>
    %cst_7 = arith.constant 0.000000e+00 : f32
    %22 = vector.broadcast %cst_7 : f32 to vector<16x128xf32>
    %23 = arith.subf %22, %21 : vector<16x128xf32>
    %c0_8 = arith.constant 0 : index
    %c0_9 = arith.constant 0 : index
    %24 = vector.load %arg5[%c0_8, %c0_9] : memref<8x128xf32, #tpu.memory_space<vmem>>, vector<8x128xf32>
    %25 = vector.shape_cast %23 : vector<16x128xf32> to vector<2x8x128xf32>
    %cst_10 = arith.constant dense<0.000000e+00> : vector<8x128xf32>
    %26 = vector.multi_reduction <add>, %25, %cst_10 [0] : vector<2x8x128xf32> to vector<8x128xf32>
    %27 = arith.addf %24, %26 : vector<8x128xf32>
    %c0_11 = arith.constant 0 : index
    %c0_12 = arith.constant 0 : index
    %28 = vector.load %arg5[%c0_11, %c0_12] : memref<8x128xf32, #tpu.memory_space<vmem>>, vector<8x128xf32>
    tpu.vector_store %arg5[%c0_11, %c0_12], %27 {strides = array<i32>} : memref<8x128xf32, #tpu.memory_space<vmem>>, vector<8x128xf32>,
    %c0_i32_13 = arith.constant 0 : i32
    %29 = arith.cmpi eq, %arg1, %c0_i32_13 : i32
    %30 = arith.extui %29 : i1 to i32
    %c0_i32_14 = arith.constant 0 : i32
    %31 = arith.cmpi ne, %30, %c0_i32_14 : i32
    scf.if %31 {
      %c0_15 = arith.constant 0 : index
      %c0_16 = arith.constant 0 : index
      %32 = vector.load %arg5[%c0_15, %c0_16] : memref<8x128xf32, #tpu.memory_space<vmem>>, vector<8x128xf32>
      %c0_17 = arith.constant 0 : index
      %c0_18 = arith.constant 0 : index
      %c0_19 = arith.constant 0 : index
      %33 = vector.load %arg4[%c0_17, %c0_18, %c0_19] : memref<1x8x128xf32, #tpu.memory_space<vmem>>, vector<1x8x128xf32>
      %34 = vector.shape_cast %33 : vector<1x8x128xf32> to vector<8x128xf32>
      %35 = vector.shape_cast %32 : vector<8x128xf32> to vector<1x8x128xf32>
      tpu.vector_store %arg4[%c0_17, %c0_18, %c0_19], %35 {strides = array<i32>} : memref<1x8x128xf32, #tpu.memory_space<vmem>>, vector<1x8x128xf32>,
    } else {
    }
    return
  }
  func.func @transform_0(%arg0: i32, %arg1: i32) -> (i32, i32) {
    %c1_i32 = arith.constant 1 : i32
    %0 = arith.muli %arg0, %c1_i32 : i32
    %1 = arith.addi %0, %arg1 : i32
    %c0_i32 = arith.constant 0 : i32
    %c0_i32_0 = arith.constant 0 : i32
    return %1, %c0_i32 : i32, i32
  }
  func.func @transform_1(%arg0: i32, %arg1: i32) -> (i32, i32) {
    %c1_i32 = arith.constant 1 : i32
    %0 = arith.muli %arg0, %c1_i32 : i32
    %1 = arith.addi %0, %arg1 : i32
    %c0_i32 = arith.constant 0 : i32
    %c0_i32_0 = arith.constant 0 : i32
    return %1, %c0_i32 : i32, i32
  }
  func.func @transform_2(%arg0: i32, %arg1: i32) -> (i32, i32, i32) {
    %c0_i32 = arith.constant 0 : i32
    %c0_i32_0 = arith.constant 0 : i32
    %c0_i32_1 = arith.constant 0 : i32
    return %arg0, %c0_i32, %c0_i32_0 : i32, i32, i32
  }
}

</mosaic_0001>

<llo_original>
// kernel: tpu_custom_call.1
$region0: #{tpu_custom_call.1}
  #allocation0 [shape = 'u32[]', space=smem, size = 0x4, offset = 0x4, fixed_abs, tag = 'smem constant byte address 0x4 - core index']
  #allocation1 [shape = 'u32[144,128]{1,0:T(1,128)}', space=vmem, size = 0x12000, scoped, tag = 'internal scratch']
  #allocation2 [shape = 'f32[8,128]{1,0:T(8,128)}', space=vmem, size = 0x1000, scoped, tag = 'scratch operand']
  %s0 = inlined_call_operand.hbm [shape: f32[16,128], index: 0, kind: input, shape index: {}]
  %s1 = inlined_call_operand.hbm [shape: f32[16,128], index: 1, kind: input, shape index: {}]
  %s2 = inlined_call_operand.hbm [shape: f32[1,8,128], index: 2, kind: output, shape index: {}]
  %s3 = sld [smem:[#allocation0]]
  $region34: #{tpu_custom_call.1} parent=0
    _
  %s5 = ssub.s32 1, %s3
  %s6 = scalar_select 0, %s5, %s3
  $region1: #{tpu_custom_call.1} parent=0
    #allocation3 [shape = 'u8[8192]{0}', space=vmem, size = 0x2000, scoped, tag = 'input window, operand 0, single buffered']
    #allocation4 [shape = 's32[1]{0}', space=sflag, size = 0x4, scoped, tag = 'scoped memory for tpu_custom_call.1']
    #allocation5 [shape = 's32[1]{0}', space=sflag, size = 0x4, scoped, tag = 'scoped memory for tpu_custom_call.1']
    #allocation6 [shape = 'u8[8192]{0}', space=vmem, size = 0x2000, scoped, tag = 'input window, operand 1, single buffered']
    #allocation7 [shape = 's32[1]{0}', space=sflag, size = 0x4, scoped, tag = 'scoped memory for tpu_custom_call.1']
    #allocation8 [shape = 'u8[4096]{0}', space=vmem, size = 0x1000, scoped, tag = 'output window, operand 0, single buffered']
    %7 = vsyncpa [#allocation4], 0
    %8 = vsyncpa [#allocation7], 0
    %9 = vsyncpa [#allocation5], 0
    // Predicated region
    $region2: #{tpu_custom_call.1} parent=1 // pred_check
      _
    $region3: #{tpu_custom_call.1} parent=1 // pred_check_branch
      %11 = sbr.rel (0) target = $region5
    $region4: #{tpu_custom_call.1} parent=1 // pred_region
      %s12 = sadd.s32 0, 0
      %s13 = smul.u32 2, %s12
      %s15 = ssub.s32 256, 256
      %16 = vsyncadd [#allocation4], %s15
      %s17 = smul.addr %s13, 128
      %s18 = scalar_lea.hbm %s0, %s17
      %s19 = sshll.u32 [#allocation3], 4
      %s20 = int_to_ptr.vmem [resolvable:$true] %s19
      %25 = dma.hbm_to_vmem [thread:$0]  %s18, 256, %s20, [#allocation4], 128, 128, 8
    $region5: #{tpu_custom_call.1} parent=1 // pred_fallthru
      _
    // Predicated region
    $region6: #{tpu_custom_call.1} parent=1 // pred_check
      _
    $region7: #{tpu_custom_call.1} parent=1 // pred_check_branch
      %27 = sbr.rel (0) target = $region9
    $region8: #{tpu_custom_call.1} parent=1 // pred_region
      %s28 = sadd.s32 0, 0
      %s29 = smul.u32 2, %s28
      %s31 = ssub.s32 256, 256
      %32 = vsyncadd [#allocation7], %s31
      %s33 = smul.addr %s29, 128
      %s34 = scalar_lea.hbm %s1, %s33
      %s35 = sshll.u32 [#allocation6], 4
      %s36 = int_to_ptr.vmem [resolvable:$true] %s35
      %41 = dma.hbm_to_vmem [thread:$0]  %s34, 256, %s36, [#allocation7], 128, 128, 8
    $region9: #{tpu_custom_call.1} parent=1 // pred_fallthru
      _
    // Predicated region
    $region10: #{tpu_custom_call.1} parent=1 // pred_check
      _
    $region11: #{tpu_custom_call.1} parent=1 // pred_check_branch
      %43 = sbr.rel (0) target = $region13
    $region12: #{tpu_custom_call.1} parent=1 // pred_region
      %44 = dma.done [#allocation4], 256
    $region13: #{tpu_custom_call.1} parent=1 // pred_fallthru
      _
    // Predicated region
    $region14: #{tpu_custom_call.1} parent=1 // pred_check
      _
    $region15: #{tpu_custom_call.1} parent=1 // pred_check_branch
      %46 = sbr.rel (0) target = $region17
    $region16: #{tpu_custom_call.1} parent=1 // pred_region
      %47 = dma.done [#allocation7], 256
    $region17: #{tpu_custom_call.1} parent=1 // pred_fallthru
      _
    %s48 = sadd.s32 0, 0
    %s49 = smul.u32 2, %s48
    %s50 = sadd.s32 0, 0
    %s51 = smul.u32 2, %s50
    %p52 = scmp.eq.s32.totalorder 0, 0
    // Predicated region
    $region18: #{tpu_custom_call.1} parent=1 // pred_check
      %p53 = pneg %p52
    $region19: #{tpu_custom_call.1} parent=1 // pred_check_branch
      %55 = sbr.rel (%p53) target = $region21
    $region20: #{tpu_custom_call.1} parent=1 // pred_region
      %56 = vst [vmem:[#allocation2] sm:$0xff] 0.0
    $region21: #{tpu_custom_call.1} parent=1 // pred_fallthru
      _
    %v57 = vld [vmem:[#allocation3] sm:$0xff]
    %v58 = vld [vmem:[#allocation3 + $0x8] sm:$0xff]
    %v59 = vld [vmem:[#allocation6] sm:$0xff]
    %v60 = vld [vmem:[#allocation6 + $0x8] sm:$0xff]
    %v61 = vmax.f32 %v57, 0.01
    %v62 = vmax.f32 %v58, 0.01
    %v63 = vmin.f32 %v61, 0.99
    %v64 = vmin.f32 %v62, 0.99
    %v65 = vsub.f32 1.0, %v63
    %v66 = vsub.f32 1.0, %v64
    %v67 = vmul.f32 %v65, %v65
    %v68 = vmul.f32 %v66, %v66
    %v69 = vmul.f32 %v59, %v67
    %v70 = vmul.f32 %v60, %v68
    %v71 = vlog2.pop %v63
    %v72 = vmul.f32 %v71, 0.6931472
    %v73 = vlog2.pop %v64
    %v74 = vmul.f32 %v73, 0.6931472
    %v75 = vmul.f32 %v69, %v72
    %v76 = vmul.f32 %v70, %v74
    %v77 = vsub.f32 1.0, %v59
    %v78 = vsub.f32 1.0, %v60
    %v79 = vmul.f32 %v63, %v63
    %v80 = vmul.f32 %v64, %v64
    %v81 = vmul.f32 %v77, %v79
    %v82 = vmul.f32 %v78, %v80
    %v83 = vlog2.pop %v65
    %v84 = vmul.f32 %v83, 0.6931472
    %v85 = vlog2.pop %v66
    %v86 = vmul.f32 %v85, 0.6931472
    %v87 = vmul.f32 %v81, %v84
    %v88 = vmul.f32 %v82, %v86
    %v89 = vadd.f32 %v75, %v87
    %v90 = vadd.f32 %v76, %v88
    %v91 = vsub.f32 0.0, %v89
    %v92 = vsub.f32 0.0, %v90
    %v93 = vld [vmem:[#allocation2] sm:$0xff]
    %v94 = vadd.f32 %v91, %v92
    %v95 = vadd.f32 %v93, %v94
    %96 = vst [vmem:[#allocation2] sm:$0xff] %v95
    // Predicated region
    $region22: #{tpu_custom_call.1} parent=1 // pred_check
      %p97 = pneg %p52
    $region23: #{tpu_custom_call.1} parent=1 // pred_check_branch
      %99 = sbr.rel (%p97) target = $region25
    $region24: #{tpu_custom_call.1} parent=1 // pred_region
      %v100 = vld [vmem:[#allocation2] sm:$0xff]
      %101 = vst [vmem:[#allocation8] sm:$0xff] %v100
    $region25: #{tpu_custom_call.1} parent=1 // pred_fallthru
      _
    // Predicated region
    $region26: #{tpu_custom_call.1} parent=1 // pred_check
      _
    $region27: #{tpu_custom_call.1} parent=1 // pred_check_branch
      %103 = sbr.rel (0) target = $region29
    $region28: #{tpu_custom_call.1} parent=1 // pred_region
      %s105 = ssub.s32 128, 128
      %106 = vsyncadd [#allocation5], %s105
      %s108 = sshll.u32 [#allocation8], 4
      %s109 = int_to_ptr.vmem [resolvable:$true] %s108
      %111 = dma.vmem_to_hbm [thread:$0]  %s109, 128, %s2, [#allocation5]
    $region29: #{tpu_custom_call.1} parent=1 // pred_fallthru
      _
    // Predicated region
    $region30: #{tpu_custom_call.1} parent=1 // pred_check
      _
    $region31: #{tpu_custom_call.1} parent=1 // pred_check_branch
      %113 = sbr.rel (0) target = $region33
    $region32: #{tpu_custom_call.1} parent=1 // pred_region
      %114 = dma.done [#allocation5], 128
    $region33: #{tpu_custom_call.1} parent=1 // pred_fallthru
      _
    %115 = vsyncpa [#allocation4], 1
    %116 = vsyncpa [#allocation7], 1
    %117 = vsyncpa [#allocation5], 1

</llo_original>
